<compile_context>
chip_gen: v7x
topology: tpu7x:2x2x1
jax: 0.10.0
libtpu: 0.0.40
codegen_flags: <defaults>
</compile_context>

<pallas_src>
import functools

import jax
import jax.numpy as jnp
from jax import lax
from jax.experimental import pallas as pl
from jax.experimental.pallas import tpu as pltpu

SMOOTH = 0.01
_LANE = 128
_TARGET_TILE_BYTES = 4 << 20    # ~4 MiB per input tile per buffer (dtype aware)
_VMEM_CAP_BYTES = 48 << 20      # <= v7x 64 MiB physical, > v5e 16 MiB default


def _slab_sum(v):
    """Reduce (r, 128) -> (8, 128) partial sums with pure VPU vreg adds."""
    r = v.shape[0]
    if r >= 8 and r % 8 == 0:
        # (r,128) -> (r//8, 8, 128): each leading index is one native (8,128)
        # tile, so the axis-0 sum is a chain of elementwise vreg adds (no XLU).
        return v.reshape(r // 8, 8, _LANE).sum(axis=0)
    # Rare path: single-tile kernels whose row extent is not a multiple of 8
    # (tiny inputs).  One sublane reduce, placed into sublane 0 of the slab.
    rowsum = jnp.sum(v, axis=0, keepdims=True)                    # (1, 128)
    sub = lax.broadcasted_iota(jnp.int32, (8, _LANE), 0)
    return jnp.where(sub == 0, jnp.broadcast_to(rowsum, (8, _LANE)), 0.0)


def _dice_kernel(x_ref, t_ref, inter_ref, denom_ref, *,
                 r_blk, rows, tiles_per_split, num_row_tiles, masked):
    p = pl.program_id(1)
    j = pl.program_id(2)

    # Output blocks are the accumulators (same block index across j).
    @pl.when(j == 0)
    def _init():
        inter_ref[...] = jnp.zeros_like(inter_ref)
        denom_ref[...] = jnp.zeros_like(denom_ref)

    # Stream in native dtype; widen to f32 on the loaded tile.
    x = x_ref[...].astype(jnp.float32)      # (r_blk, 128)
    t = t_ref[...].astype(jnp.float32)

    def _acc(xv, tv):
        # sum(x) + sum(t) == sum(x + t): two slab reductions instead of three.
        inter_ref[...] += _slab_sum(xv * tv)
        denom_ref[...] += _slab_sum(xv + tv)

    if not masked:
        _acc(x, t)
    else:
        g = p * tiles_per_split + j          # global row-tile index
        last = num_row_tiles - 1

        @pl.when(g < last)
        def _full():
            _acc(x, t)

        @pl.when(g == last)
        def _partial():
            # Only the final row tile extends past `rows`; its trailing rows
            # hold undefined VMEM contents, so zero them before reducing.
            # This mask executes on exactly ONE grid step.
            row = g * r_blk + lax.broadcasted_iota(jnp.int32, x.shape, 0)
            keep = row < rows
            _acc(jnp.where(keep, x, 0.0), jnp.where(keep, t, 0.0))


def dice_loss(inputs, targets, *, tile_bytes=_TARGET_TILE_BYTES):
    """Pallas TPU implementation of DiceLoss.forward.

    inputs, targets: (N, C, H, W) arrays (C=1 in the reference module).
    Returns a scalar float32 loss identical to the PyTorch module.
    """
    n = inputs.shape[0]
    x = inputs.reshape(n, -1)
    t = targets.reshape(n, -1)
    # Stream boolean masks as 1 B/elem; the in-kernel astype(f32) widens them.
    if t.dtype == jnp.bool_:
        t = t.astype(jnp.int8)
    if x.dtype == jnp.bool_:
        x = x.astype(jnp.int8)
    d = x.shape[1]

    # Fallback only: pad the flattened feature dim to a 128 multiple (zero pad
    # is exact for all sums involved).  Free when H*W is 128-aligned (typical).
    # TODO(synk): mask the final lane chunk in-kernel instead of paying a full
    # HBM pad copy when H*W is not 128-aligned.
    d_pad = ((d + _LANE - 1) // _LANE) * _LANE
    if d_pad != d:
        x = jnp.pad(x, ((0, 0), (0, d_pad - d)))
        t = jnp.pad(t, ((0, 0), (0, d_pad - d)))

    rows = d_pad // _LANE
    x3 = x.reshape(n, rows, _LANE)
    t3 = t.reshape(n, rows, _LANE)

    # ---- row-tile sizing (dtype aware, by bytes) ---------------------------
    item_max = max(x3.dtype.itemsize, t3.dtype.itemsize)
    item_min = min(x3.dtype.itemsize, t3.dtype.itemsize)
    sub_req = max(8, 32 // item_min)         # sublane tile of narrowest dtype
    target_rows = max(sub_req, tile_bytes // (_LANE * item_max))

    masked = False
    if rows <= target_rows:
        r_blk = rows                         # whole sample in one row tile
        # v7x: odd/small batches leave a TensorCore idle; split the single
        # tile in two (extra "parallel" grid axis below) when each half is
        # still large enough to keep DMA amortization good on 1-TC chips.
        half = -(-rows // 2)
        half = -(-half // sub_req) * sub_req
        if (n % 2 == 1 and rows >= 2 * sub_req
                and half * _LANE * item_max >= (256 << 10)):
            r_blk = half
            masked = rows % r_blk != 0
    else:
        # Prefer a clean divisor of `rows` (no mask on any step) as long as it
        # keeps tiles reasonably large; otherwise mask only the last tile.
        best = 0
        start = (min(target_rows, rows) // sub_req) * sub_req
        for cand in range(start, sub_req - 1, -sub_req):
            if rows % cand == 0:
                best = cand
                break
        if best >= max(sub_req, target_rows // 2):
            r_blk = best
        else:
            r_blk = max(sub_req, (target_rows // sub_req) * sub_req)
            masked = rows % r_blk != 0

    num_row_tiles = pl.cdiv(rows, r_blk)

    # ---- optional parallel split of the row axis (free on 1-TC chips) ------
    if n % 2 == 1 and num_row_tiles % 2 == 0 and num_row_tiles >= 2:
        p_split, tiles_per_split = 2, num_row_tiles // 2
    else:
        p_split, tiles_per_split = 1, num_row_tiles

    kernel = functools.partial(
        _dice_kernel, r_blk=r_blk, rows=rows,
        tiles_per_split=tiles_per_split, num_row_tiles=num_row_tiles,
        masked=masked)

    # ---- VMEM budget: 2 inputs x 2 buffers x one tile each (+ tiny outputs).
    tile_bytes_x = r_blk * _LANE * x3.dtype.itemsize
    tile_bytes_t = r_blk * _LANE * t3.dtype.itemsize
    vmem_need = 2 * (tile_bytes_x + tile_bytes_t) + 4 * (8 * _LANE * 4)
    vmem_limit = int(min(_VMEM_CAP_BYTES, max(32 << 20, vmem_need + (8 << 20))))

    out_bytes = 2 * n * p_split * 8 * _LANE * 4
    bytes_accessed = (x3.size * x3.dtype.itemsize
                      + t3.size * t3.dtype.itemsize + out_bytes)

    def _in_map(i, p, j):
        return (i, p * tiles_per_split + j, 0)

    inter, denom = pl.pallas_call(
        kernel,
        out_shape=(
            jax.ShapeDtypeStruct((n, p_split, 8, _LANE), jnp.float32),
            jax.ShapeDtypeStruct((n, p_split, 8, _LANE), jnp.float32),
        ),
        grid=(n, p_split, tiles_per_split),
        in_specs=[
            pl.BlockSpec((None, r_blk, _LANE), _in_map),
            pl.BlockSpec((None, r_blk, _LANE), _in_map),
        ],
        out_specs=(
            pl.BlockSpec((None, None, 8, _LANE), lambda i, p, j: (i, p, 0, 0)),
            pl.BlockSpec((None, None, 8, _LANE), lambda i, p, j: (i, p, 0, 0)),
        ),
        compiler_params=pltpu.CompilerParams(
            dimension_semantics=("parallel", "parallel", "arbitrary"),
            vmem_limit_bytes=vmem_limit),
        cost_estimate=pl.CostEstimate(
            flops=4 * n * rows * _LANE,
            transcendentals=0,
            bytes_accessed=int(bytes_accessed)),
    )(x3, t3)

    # Tiny O(N * 1024) epilogue: cross-lane reduce of the slabs + dice combine.
    inter_n = inter.sum(axis=(1, 2, 3))
    denom_n = denom.sum(axis=(1, 2, 3))
    dice = 2.0 * (inter_n + SMOOTH) / (denom_n + 2.0 * SMOOTH)
    return 1.0 - jnp.sum(dice) / n


def _dice_loss_ref(inputs, targets):
    # Pure-JAX reference mirroring the PyTorch module exactly.
    n = targets.shape[0]
    x = inputs.reshape(n, -1).astype(jnp.float32)
    t = targets.reshape(n, -1).astype(jnp.float32)
    inter = (x * t).sum(1)
    loss = 2.0 * (inter + SMOOTH) / (x.sum(1) + t.sum(1) + 2.0 * SMOOTH)
    return 1.0 - loss.sum() / n


if __name__ == "__main__":
    key = jax.random.PRNGKey(0)
    keys = jax.random.split(key, 10)

    # 1) Small shape matching the module docstring: (N, 1, H, W), f32.
    N, C, H, W = 2, 1, 16, 16
    inputs = jax.nn.sigmoid(jax.random.normal(keys[0], (N, C, H, W), jnp.float32))
    targets = (jax.random.uniform(keys[1], (N, C, H, W)) > 0.5).astype(jnp.float32)
    loss = dice_loss(inputs, targets)
    jax.block_until_ready(loss)
    ref = _dice_loss_ref(inputs, targets)
    assert jnp.allclose(loss, ref, atol=1e-5, rtol=1e-5), (loss, ref)

    # 2) bf16 inputs: native-dtype streaming, f32 cast happens in-kernel.
    loss_bf = dice_loss(inputs.astype(jnp.bfloat16), targets.astype(jnp.bfloat16))
    jax.block_until_ready(loss_bf)
    ref_bf = _dice_loss_ref(inputs.astype(jnp.bfloat16),
                            targets.astype(jnp.bfloat16))
    assert jnp.allclose(loss_bf, ref_bf, atol=1e-4, rtol=1e-4), (loss_bf, ref_bf)

    # 3) Larger image + odd batch: exercises the forced row split (P=2).
    N2, H2, W2 = 3, 640, 640
    inputs2 = jax.nn.sigmoid(jax.random.normal(keys[2], (N2, 1, H2, W2), jnp.float32))
    targets2 = (jax.random.uniform(keys[3], (N2, 1, H2, W2)) > 0.5).astype(jnp.float32)
    loss2 = dice_loss(inputs2, targets2)
    jax.block_until_ready(loss2)
    ref2 = _dice_loss_ref(inputs2, targets2)
    assert jnp.allclose(loss2, ref2, atol=1e-4, rtol=1e-4), (loss2, ref2)

    # 4) Tiny tile budget -> multi-tile accumulation with a masked FINAL tile
    #    only (rows=100, r_blk=8 -> 13 tiles, last one partial).
    N3, H3, W3 = 2, 80, 160
    inputs3 = jax.nn.sigmoid(jax.random.normal(keys[4], (N3, 1, H3, W3), jnp.float32))
    targets3 = (jax.random.uniform(keys[5], (N3, 1, H3, W3)) > 0.5).astype(jnp.float32)
    loss3 = dice_loss(inputs3, targets3, tile_bytes=4096)
    jax.block_until_ready(loss3)
    ref3 = _dice_loss_ref(inputs3, targets3)
    assert jnp.allclose(loss3, ref3, atol=1e-5, rtol=1e-5), (loss3, ref3)

    # 5) Odd batch + even tile count -> row axis split across the second
    #    "parallel" grid axis (rows=128, r_blk=8 -> P=2, J=8), clean tiling.
    N4, H4, W4 = 3, 64, 256
    inputs4 = jax.nn.sigmoid(jax.random.normal(keys[6], (N4, 1, H4, W4), jnp.float32))
    targets4 = (jax.random.uniform(keys[7], (N4, 1, H4, W4)) > 0.5).astype(jnp.float32)
    loss4 = dice_loss(inputs4, targets4, tile_bytes=4096)
    jax.block_until_ready(loss4)
    ref4 = _dice_loss_ref(inputs4, targets4)
    assert jnp.allclose(loss4, ref4, atol=1e-5, rtol=1e-5), (loss4, ref4)

    # 6) Boolean targets: streamed as int8 (1 B/elem) and widened in-kernel;
    #    tiled path with r_blk a multiple of 32 (rows=128, r_blk=64).
    N5, H5, W5 = 2, 128, 128
    inputs5 = jax.nn.sigmoid(jax.random.normal(keys[8], (N5, 1, H5, W5), jnp.float32))
    targets5 = jax.random.uniform(keys[9], (N5, 1, H5, W5)) > 0.5
    loss5 = dice_loss(inputs5, targets5, tile_bytes=32768)
    jax.block_until_ready(loss5)
    ref5 = _dice_loss_ref(inputs5, targets5)
    assert jnp.allclose(loss5, ref5, atol=1e-5, rtol=1e-5), (loss5, ref5)

    print("KERNEL_OK")
</pallas_src>

<mosaic_0001>
module attributes {stable_mosaic.version = 11 : i64} {
  func.func @_dice_kernel(%arg0: i32, %arg1: i32, %arg2: i32, %arg3: memref<1x2x128xf32, #tpu.memory_space<vmem>>, %arg4: memref<1x2x128xf32, #tpu.memory_space<vmem>>, %arg5: memref<1x1x8x128xf32, #tpu.memory_space<vmem>>, %arg6: memref<1x1x8x128xf32, #tpu.memory_space<vmem>>) attributes {dimension_semantics = [#tpu.dimension_semantics<parallel>, #tpu.dimension_semantics<parallel>, #tpu.dimension_semantics<arbitrary>], iteration_bounds = array<i64: 2, 1, 1>, scalar_prefetch = 0 : i64, scratch_operands = 0 : i64, tpu.core_type = #tpu.core_type<tc>, window_params = [{transform_indices = @transform_0, window_bounds = array<i64: 1, 2, 128>}, {transform_indices = @transform_1, window_bounds = array<i64: 1, 2, 128>}, {transform_indices = @transform_2, window_bounds = array<i64: 1, 1, 8, 128>}, {transform_indices = @transform_3, window_bounds = array<i64: 1, 1, 8, 128>}]} {
    %c0_i32 = arith.constant 0 : i32
    %0 = arith.cmpi eq, %arg2, %c0_i32 : i32
    %1 = arith.extui %0 : i1 to i32
    %c0_i32_0 = arith.constant 0 : i32
    %2 = arith.cmpi ne, %1, %c0_i32_0 : i32
    scf.if %2 {
      %cst_27 = arith.constant 0.000000e+00 : f32
      %39 = vector.broadcast %cst_27 : f32 to vector<8x128xf32>
      %c0_28 = arith.constant 0 : index
      %c0_29 = arith.constant 0 : index
      %c0_30 = arith.constant 0 : index
      %c0_31 = arith.constant 0 : index
      %40 = vector.load %arg5[%c0_28, %c0_29, %c0_30, %c0_31] : memref<1x1x8x128xf32, #tpu.memory_space<vmem>>, vector<1x1x8x128xf32>
      %41 = vector.shape_cast %40 : vector<1x1x8x128xf32> to vector<8x128xf32>
      %42 = vector.shape_cast %39 : vector<8x128xf32> to vector<1x1x8x128xf32>
      tpu.vector_store %arg5[%c0_28, %c0_29, %c0_30, %c0_31], %42 {strides = array<i32>} : memref<1x1x8x128xf32, #tpu.memory_space<vmem>>, vector<1x1x8x128xf32>,
      %cst_32 = arith.constant 0.000000e+00 : f32
      %43 = vector.broadcast %cst_32 : f32 to vector<8x128xf32>
      %c0_33 = arith.constant 0 : index
      %c0_34 = arith.constant 0 : index
      %c0_35 = arith.constant 0 : index
      %c0_36 = arith.constant 0 : index
      %44 = vector.load %arg6[%c0_33, %c0_34, %c0_35, %c0_36] : memref<1x1x8x128xf32, #tpu.memory_space<vmem>>, vector<1x1x8x128xf32>
      %45 = vector.shape_cast %44 : vector<1x1x8x128xf32> to vector<8x128xf32>
      %46 = vector.shape_cast %43 : vector<8x128xf32> to vector<1x1x8x128xf32>
      tpu.vector_store %arg6[%c0_33, %c0_34, %c0_35, %c0_36], %46 {strides = array<i32>} : memref<1x1x8x128xf32, #tpu.memory_space<vmem>>, vector<1x1x8x128xf32>,
    } else {
    }
    %c0 = arith.constant 0 : index
    %c0_1 = arith.constant 0 : index
    %c0_2 = arith.constant 0 : index
    %3 = vector.load %arg3[%c0, %c0_1, %c0_2] : memref<1x2x128xf32, #tpu.memory_space<vmem>>, vector<1x2x128xf32>
    %4 = vector.shape_cast %3 : vector<1x2x128xf32> to vector<2x128xf32>
    %c0_3 = arith.constant 0 : index
    %c0_4 = arith.constant 0 : index
    %c0_5 = arith.constant 0 : index
    %5 = vector.load %arg4[%c0_3, %c0_4, %c0_5] : memref<1x2x128xf32, #tpu.memory_space<vmem>>, vector<1x2x128xf32>
    %6 = vector.shape_cast %5 : vector<1x2x128xf32> to vector<2x128xf32>
    %c0_6 = arith.constant 0 : index
    %c0_7 = arith.constant 0 : index
    %c0_8 = arith.constant 0 : index
    %c0_9 = arith.constant 0 : index
    %7 = vector.load %arg5[%c0_6, %c0_7, %c0_8, %c0_9] : memref<1x1x8x128xf32, #tpu.memory_space<vmem>>, vector<1x1x8x128xf32>
    %8 = vector.shape_cast %7 : vector<1x1x8x128xf32> to vector<8x128xf32>
    %9 = arith.mulf %4, %6 : vector<2x128xf32>
    %cst = arith.constant dense<0.000000e+00> : vector<128xf32>
    %10 = vector.multi_reduction <add>, %9, %cst [0] : vector<2x128xf32> to vector<128xf32>
    %11 = vector.shape_cast %10 : vector<128xf32> to vector<1x128xf32>
    %12 = tpu.iota {dimensions = array<i32: 0>} : vector<8x128xi32>
    %c0_i32_10 = arith.constant 0 : i32
    %13 = vector.broadcast %c0_i32_10 : i32 to vector<8x128xi32>
    %14 = arith.cmpi eq, %12, %13 : vector<8x128xi32>
    %15 = vector.shape_cast %11 : vector<1x128xf32> to vector<1x128xf32>
    %16 = vector.broadcast %15 : vector<1x128xf32> to vector<8x128xf32>
    %cst_11 = arith.constant 0.000000e+00 : f32
    %17 = vector.broadcast %cst_11 : f32 to vector<8x128xf32>
    %18 = arith.select %14, %16, %17 : vector<8x128xi1>, vector<8x128xf32>
    %19 = arith.addf %8, %18 : vector<8x128xf32>
    %c0_12 = arith.constant 0 : index
    %c0_13 = arith.constant 0 : index
    %c0_14 = arith.constant 0 : index
    %c0_15 = arith.constant 0 : index
    %20 = vector.load %arg5[%c0_12, %c0_13, %c0_14, %c0_15] : memref<1x1x8x128xf32, #tpu.memory_space<vmem>>, vector<1x1x8x128xf32>
    %21 = vector.shape_cast %20 : vector<1x1x8x128xf32> to vector<8x128xf32>
    %22 = vector.shape_cast %19 : vector<8x128xf32> to vector<1x1x8x128xf32>
    tpu.vector_store %arg5[%c0_12, %c0_13, %c0_14, %c0_15], %22 {strides = array<i32>} : memref<1x1x8x128xf32, #tpu.memory_space<vmem>>, vector<1x1x8x128xf32>,
    %c0_16 = arith.constant 0 : index
    %c0_17 = arith.constant 0 : index
    %c0_18 = arith.constant 0 : index
    %c0_19 = arith.constant 0 : index
    %23 = vector.load %arg6[%c0_16, %c0_17, %c0_18, %c0_19] : memref<1x1x8x128xf32, #tpu.memory_space<vmem>>, vector<1x1x8x128xf32>
    %24 = vector.shape_cast %23 : vector<1x1x8x128xf32> to vector<8x128xf32>
    %25 = arith.addf %4, %6 : vector<2x128xf32>
    %cst_20 = arith.constant dense<0.000000e+00> : vector<128xf32>
    %26 = vector.multi_reduction <add>, %25, %cst_20 [0] : vector<2x128xf32> to vector<128xf32>
    %27 = vector.shape_cast %26 : vector<128xf32> to vector<1x128xf32>
    %28 = tpu.iota {dimensions = array<i32: 0>} : vector<8x128xi32>
    %c0_i32_21 = arith.constant 0 : i32
    %29 = vector.broadcast %c0_i32_21 : i32 to vector<8x128xi32>
    %30 = arith.cmpi eq, %28, %29 : vector<8x128xi32>
    %31 = vector.shape_cast %27 : vector<1x128xf32> to vector<1x128xf32>
    %32 = vector.broadcast %31 : vector<1x128xf32> to vector<8x128xf32>
    %cst_22 = arith.constant 0.000000e+00 : f32
    %33 = vector.broadcast %cst_22 : f32 to vector<8x128xf32>
    %34 = arith.select %30, %32, %33 : vector<8x128xi1>, vector<8x128xf32>
    %35 = arith.addf %24, %34 : vector<8x128xf32>
    %c0_23 = arith.constant 0 : index
    %c0_24 = arith.constant 0 : index
    %c0_25 = arith.constant 0 : index
    %c0_26 = arith.constant 0 : index
    %36 = vector.load %arg6[%c0_23, %c0_24, %c0_25, %c0_26] : memref<1x1x8x128xf32, #tpu.memory_space<vmem>>, vector<1x1x8x128xf32>
    %37 = vector.shape_cast %36 : vector<1x1x8x128xf32> to vector<8x128xf32>
    %38 = vector.shape_cast %35 : vector<8x128xf32> to vector<1x1x8x128xf32>
    tpu.vector_store %arg6[%c0_23, %c0_24, %c0_25, %c0_26], %38 {strides = array<i32>} : memref<1x1x8x128xf32, #tpu.memory_space<vmem>>, vector<1x1x8x128xf32>,
    return
  }
  func.func @transform_0(%arg0: i32, %arg1: i32, %arg2: i32) -> (i32, i32, i32) {
    %c1_i32 = arith.constant 1 : i32
    %0 = arith.muli %arg1, %c1_i32 : i32
    %1 = arith.addi %0, %arg2 : i32
    %c0_i32 = arith.constant 0 : i32
    %c0_i32_0 = arith.constant 0 : i32
    return %arg0, %1, %c0_i32 : i32, i32, i32
  }
  func.func @transform_1(%arg0: i32, %arg1: i32, %arg2: i32) -> (i32, i32, i32) {
    %c1_i32 = arith.constant 1 : i32
    %0 = arith.muli %arg1, %c1_i32 : i32
    %1 = arith.addi %0, %arg2 : i32
    %c0_i32 = arith.constant 0 : i32
    %c0_i32_0 = arith.constant 0 : i32
    return %arg0, %1, %c0_i32 : i32, i32, i32
  }
  func.func @transform_2(%arg0: i32, %arg1: i32, %arg2: i32) -> (i32, i32, i32, i32) {
    %c0_i32 = arith.constant 0 : i32
    %c0_i32_0 = arith.constant 0 : i32
    %c0_i32_1 = arith.constant 0 : i32
    return %arg0, %arg1, %c0_i32, %c0_i32_0 : i32, i32, i32, i32
  }
  func.func @transform_3(%arg0: i32, %arg1: i32, %arg2: i32) -> (i32, i32, i32, i32) {
    %c0_i32 = arith.constant 0 : i32
    %c0_i32_0 = arith.constant 0 : i32
    %c0_i32_1 = arith.constant 0 : i32
    return %arg0, %arg1, %c0_i32, %c0_i32_0 : i32, i32, i32, i32
  }
}

</mosaic_0001>

<llo_original>
// kernel: tpu_custom_call.1
$region0: #{tpu_custom_call.1}
  #allocation0 [shape = 'u32[]', space=smem, size = 0x4, offset = 0x4, fixed_abs, tag = 'smem constant byte address 0x4 - core index']
  #allocation1 [shape = 'u32[144,128]{1,0:T(1,128)}', space=vmem, size = 0x12000, scoped, tag = 'internal scratch']
  %s0 = inlined_call_operand.hbm [shape: f32[2,2,128], index: 0, kind: input, shape index: {}]
  %s1 = inlined_call_operand.hbm [shape: f32[2,2,128], index: 1, kind: input, shape index: {}]
  %s2 = inlined_call_operand.hbm [shape: f32[2,1,8,128], index: 2, kind: output, shape index: {0}]
  %s3 = inlined_call_operand.hbm [shape: f32[2,1,8,128], index: 3, kind: output, shape index: {1}]
  %4 = xla_tuple %s2, %s3
  %s5 = sld [smem:[#allocation0]]
  $region61: #{tpu_custom_call.1} parent=0
    _
  %s7 = ssub.s32 1, %s5
  %s8 = scalar_select 0, %s7, %s5
  $region1: #{tpu_custom_call.1} parent=0
    #allocation2 [shape = 'u8[2048]{0}', space=vmem, size = 0x800, scoped, tag = 'input window, operand 0']
    #allocation3 [shape = 's32[2]{0}', space=sflag, size = 0x8, scoped, tag = 'scoped memory for tpu_custom_call.1']
    #allocation4 [shape = 's32[2]{0}', space=sflag, size = 0x8, scoped, tag = 'scoped memory for tpu_custom_call.1']
    #allocation5 [shape = 'u8[2048]{0}', space=vmem, size = 0x800, scoped, tag = 'input window, operand 1']
    #allocation6 [shape = 's32[2]{0}', space=sflag, size = 0x8, scoped, tag = 'scoped memory for tpu_custom_call.1']
    #allocation7 [shape = 'u8[8192]{0}', space=vmem, size = 0x2000, scoped, tag = 'output window, operand 0']
    #allocation8 [shape = 'u8[8192]{0}', space=vmem, size = 0x2000, scoped, tag = 'output window, operand 1']
    #allocation9 [shape = 's32[2]{0}', space=sflag, size = 0x8, scoped, tag = 'scoped memory for tpu_custom_call.1']
    %9 = vsyncpa [#allocation3], 0
    %s10 = scalar_lea.sflag [#allocation3], 1
    %11 = vsyncpa %s10, 0
    %12 = vsyncpa [#allocation6], 0
    %s13 = scalar_lea.sflag [#allocation6], 1
    %14 = vsyncpa %s13, 0
    %15 = vsyncpa [#allocation4], 0
    %s16 = scalar_lea.sflag [#allocation4], 1
    %17 = vsyncpa %s16, 0
    %18 = vsyncpa [#allocation9], 0
    %s19 = scalar_lea.sflag [#allocation9], 1
    %20 = vsyncpa %s19, 0
    loop: start=0, step=1, limit=4
    $region2: #{tpu_custom_call.1} parent=1 // loop_pre_header
      _
    $region3: #{tpu_custom_call.1} parent=1 // loop_header
      %s22 = sphi 0, %s26
      %p23 = scmp.ge.s32.totalorder %s22, 4
      %s29 = sphi 0, %s48
      %s30 = sphi 0, %s44
      %s31 = sphi 0, %s40
      %s32 = sphi 0, %s29
      %s33 = sphi 0, %s30
      %s34 = sphi 0, %s31
      %s35 = sphi 0, %s32
      %s36 = sphi 0, %s33
      %s37 = sphi 0, %s34
      %s55 = sphi 0, %s57
      %s58 = sphi 0, %s55
      %s59 = sphi 0, %s58
      %s75 = sphi 0, %s59
      %s85 = sphi 0, %s87
      %s88 = sphi 0, %s85
      %s89 = sphi 0, %s88
      %s105 = sphi 0, %s89
      %s113 = sphi 0, %s115
      %s116 = sphi 0, %s113
      %s117 = sphi 0, %s116
      %s133 = sphi 0, %s117
      %s141 = sphi 0, %s143
      %s144 = sphi 0, %s141
      %s145 = sphi 0, %s144
      %s161 = sphi 0, %s145
    $region4: #{tpu_custom_call.1} parent=1 // loop_header_branch
      %25 = sbr.rel (%p23) target = $region8
    $region5: #{tpu_custom_call.1} parent=1 // loop_body
      %s27 = ssub.s32 %s22, 1
      %s28 = ssub.s32 %s22, 2
      %s38 = sadd.s32 1, %s31
      %p39 = scmp.ge.s32.totalorder %s38, 1
      %s40 = scalar_select %p39, 0, %s38
      %s41 = sadd.s32 1, %s30
      %s42 = scalar_select %p39, %s41, %s30
      %p43 = scmp.ge.s32.totalorder %s42, 1
      %s44 = scalar_select %p43, 0, %s42
      %s45 = sadd.s32 1, %s29
      %s46 = scalar_select %p43, %s45, %s29
      %p47 = scmp.ge.s32.totalorder %s46, 2
      %s48 = scalar_select %p47, 0, %s46
      %s49 = sadd.s32 %s30, %s31
      %s50 = sadd.s32 %s44, %s40
      %s51 = ssub.s32 %s29, %s48
      %s52 = ssub.s32 %s49, %s50
      %s53 = sor.u32 %s51, %s52
      %p54 = scmp.eq.s32.totalorder %s53, 0
      %s56 = sadd.s32 %s55, 1
      %s57 = scalar_select %p54, %s55, %s56
      %p60 = pneg %p54
      %p61 = scmp.eq.s32.totalorder %s22, 1
      %p62 = por %p60, %p61
      %p63 = scmp.ne.s32.totalorder %s55, %s58
      %p64 = scmp.eq.s32.totalorder %s22, 0
      %p65 = por %p63, %p64
      %p66 = scmp.ne.s32.totalorder %s55, %s58
      %p67 = scmp.eq.s32.totalorder %s27, 1
      %p68 = por %p66, %p67
      %p69 = scmp.ne.s32.totalorder %s58, %s59
      %p70 = scmp.eq.s32.totalorder %s27, 0
      %p71 = por %p69, %p70
      %p72 = scmp.ne.s32.totalorder %s58, %s59
      %p73 = scmp.eq.s32.totalorder %s28, 1
      %p74 = por %p72, %p73
      %p76 = scmp.ne.s32.totalorder %s59, %s75
      %p77 = scmp.eq.s32.totalorder %s28, 0
      %p78 = por %p76, %p77
      %s79 = sadd.s32 %s30, %s31
      %s80 = sadd.s32 %s44, %s40
      %s81 = ssub.s32 %s29, %s48
      %s82 = ssub.s32 %s79, %s80
      %s83 = sor.u32 %s81, %s82
      %p84 = scmp.eq.s32.totalorder %s83, 0
      %s86 = sadd.s32 %s85, 1
      %s87 = scalar_select %p84, %s85, %s86
      %p90 = pneg %p84
      %p91 = scmp.eq.s32.totalorder %s22, 1
      %p92 = por %p90, %p91
      %p93 = scmp.ne.s32.totalorder %s85, %s88
      %p94 = scmp.eq.s32.totalorder %s22, 0
      %p95 = por %p93, %p94
      %p96 = scmp.ne.s32.totalorder %s85, %s88
      %p97 = scmp.eq.s32.totalorder %s27, 1
      %p98 = por %p96, %p97
      %p99 = scmp.ne.s32.totalorder %s88, %s89
      %p100 = scmp.eq.s32.totalorder %s27, 0
      %p101 = por %p99, %p100
      %p102 = scmp.ne.s32.totalorder %s88, %s89
      %p103 = scmp.eq.s32.totalorder %s28, 1
      %p104 = por %p102, %p103
      %p106 = scmp.ne.s32.totalorder %s89, %s105
      %p107 = scmp.eq.s32.totalorder %s28, 0
      %p108 = por %p106, %p107
      %s109 = ssub.s32 %s29, %s48
      %s110 = ssub.s32 %s30, %s44
      %s111 = sor.u32 %s109, %s110
      %p112 = scmp.eq.s32.totalorder %s111, 0
      %s114 = sadd.s32 %s113, 1
      %s115 = scalar_select %p112, %s113, %s114
      %p118 = pneg %p112
      %p119 = scmp.eq.s32.totalorder %s22, 1
      %p120 = por %p118, %p119
      %p121 = scmp.ne.s32.totalorder %s113, %s116
      %p122 = scmp.eq.s32.totalorder %s22, 0
      %p123 = por %p121, %p122
      %p124 = scmp.ne.s32.totalorder %s113, %s116
      %p125 = scmp.eq.s32.totalorder %s27, 1
      %p126 = por %p124, %p125
      %p127 = scmp.ne.s32.totalorder %s116, %s117
      %p128 = scmp.eq.s32.totalorder %s27, 0
      %p129 = por %p127, %p128
      %p130 = scmp.ne.s32.totalorder %s116, %s117
      %p131 = scmp.eq.s32.totalorder %s28, 1
      %p132 = por %p130, %p131
      %p134 = scmp.ne.s32.totalorder %s117, %s133
      %p135 = scmp.eq.s32.totalorder %s28, 0
      %p136 = por %p134, %p135
      %s137 = ssub.s32 %s29, %s48
      %s138 = ssub.s32 %s30, %s44
      %s139 = sor.u32 %s137, %s138
      %p140 = scmp.eq.s32.totalorder %s139, 0
      %s142 = sadd.s32 %s141, 1
      %s143 = scalar_select %p140, %s141, %s142
      %p146 = pneg %p140
      %p147 = scmp.eq.s32.totalorder %s22, 1
      %p148 = por %p146, %p147
      %p149 = scmp.ne.s32.totalorder %s141, %s144
      %p150 = scmp.eq.s32.totalorder %s22, 0
      %p151 = por %p149, %p150
      %p152 = scmp.ne.s32.totalorder %s141, %s144
      %p153 = scmp.eq.s32.totalorder %s27, 1
      %p154 = por %p152, %p153
      %p155 = scmp.ne.s32.totalorder %s144, %s145
      %p156 = scmp.eq.s32.totalorder %s27, 0
      %p157 = por %p155, %p156
      %p158 = scmp.ne.s32.totalorder %s144, %s145
      %p159 = scmp.eq.s32.totalorder %s28, 1
      %p160 = por %p158, %p159
      %p162 = scmp.ne.s32.totalorder %s145, %s161
      %p163 = scmp.eq.s32.totalorder %s28, 0
      %p164 = por %p162, %p163
      %p165 = scmp.le.s32.totalorder 1, %s22
      %p166 = scmp.lt.s32.totalorder %s22, 3
      %p167 = pnand %p165, %p166
      %p168 = pneg %p167
      // Predicated region
      $region9: #{tpu_custom_call.1} parent=5 // pred_check
        _
      $region10: #{tpu_custom_call.1} parent=5 // pred_check_branch
        %170 = sbr.rel (%p167) target = $region12
      $region11: #{tpu_custom_call.1} parent=5 // pred_region
        %s171 = ssub.s32 %s22, 1
      $region12: #{tpu_custom_call.1} parent=5 // pred_fallthru
        _
      %p172 = scmp.lt.s32.totalorder %s22, 2
      // Predicated region
      $region13: #{tpu_custom_call.1} parent=5 // pred_check
        %p173 = pneg %p172
      $region14: #{tpu_custom_call.1} parent=5 // pred_check_branch
        %175 = sbr.rel (%p173) target = $region16
      $region15: #{tpu_custom_call.1} parent=5 // pred_region
        // Predicated region
        $region17: #{tpu_custom_call.1} parent=15 // pred_check
          %p176 = pneg %p65
        $region18: #{tpu_custom_call.1} parent=15 // pred_check_branch
          %178 = sbr.rel (%p176) target = $region20
        $region19: #{tpu_custom_call.1} parent=15 // pred_region
          %s179 = sand.u32 %s55, 1
          %s180 = scalar_lea.sflag [#allocation3], %s179
          %s181 = sand.u32 %s55, 1
          %s182 = smul.addr %s181, 2
          %s183 = scalar_lea.vmem [#allocation2], %s182
          %s184 = sadd.s32 %s30, %s31
          %s186 = ssub.s32 32, 32
          %187 = vsyncadd %s180, %s186
          %s188 = sadd.s32 %s184, %s29
          %s189 = smul.addr %s188, 32
          %s190 = scalar_lea.hbm %s0, %s189
          %s192 = sshll.u32 %s183, 4
          %s193 = int_to_ptr.vmem [resolvable:$true] %s192
          %195 = dma.hbm_to_vmem [thread:$0]  %s190, 32, %s193, %s180
        $region20: #{tpu_custom_call.1} parent=15 // pred_fallthru
          _
        // Predicated region
        $region21: #{tpu_custom_call.1} parent=15 // pred_check
          %p196 = pneg %p95
        $region22: #{tpu_custom_call.1} parent=15 // pred_check_branch
          %198 = sbr.rel (%p196) target = $region24
        $region23: #{tpu_custom_call.1} parent=15 // pred_region
          %s199 = sand.u32 %s85, 1
          %s200 = scalar_lea.sflag [#allocation6], %s199
          %s201 = sand.u32 %s85, 1
          %s202 = smul.addr %s201, 2
          %s203 = scalar_lea.vmem [#allocation5], %s202
          %s204 = sadd.s32 %s30, %s31
          %s206 = ssub.s32 32, 32
          %207 = vsyncadd %s200, %s206
          %s208 = sadd.s32 %s204, %s29
          %s209 = smul.addr %s208, 32
          %s210 = scalar_lea.hbm %s1, %s209
          %s212 = sshll.u32 %s203, 4
          %s213 = int_to_ptr.vmem [resolvable:$true] %s212
          %215 = dma.hbm_to_vmem [thread:$0]  %s210, 32, %s213, %s200
        $region24: #{tpu_custom_call.1} parent=15 // pred_fallthru
          _
      $region16: #{tpu_custom_call.1} parent=5 // pred_fallthru
        _
      %p216 = scmp.le.s32.totalorder 1, %s22
      %p217 = scmp.lt.s32.totalorder %s22, 3
      %p218 = pnand %p216, %p217
      %p219 = pneg %p218
      // Predicated region
      $region25: #{tpu_custom_call.1} parent=5 // pred_check
        _
      $region26: #{tpu_custom_call.1} parent=5 // pred_check_branch
        %221 = sbr.rel (%p218) target = $region28
      $region27: #{tpu_custom_call.1} parent=5 // pred_region
        %s222 = ssub.s32 %s22, 1
        %s223 = sand.u32 %s58, 1
        %s224 = scalar_lea.sflag [#allocation3], %s223
        %s225 = sand.u32 %s58, 1
        %s226 = smul.addr %s225, 2
        %s227 = scalar_lea.vmem [#allocation2], %s226
        // Predicated region
        $region29: #{tpu_custom_call.1} parent=27 // pred_check
          %p228 = pneg %p71
        $region30: #{tpu_custom_call.1} parent=27 // pred_check_branch
          %230 = sbr.rel (%p228) target = $region32
        $region31: #{tpu_custom_call.1} parent=27 // pred_region
          %231 = dma.done %s224, 32
        $region32: #{tpu_custom_call.1} parent=27 // pred_fallthru
          _
        %s232 = sand.u32 %s88, 1
        %s233 = scalar_lea.sflag [#allocation6], %s232
        %s234 = sand.u32 %s88, 1
        %s235 = smul.addr %s234, 2
        %s236 = scalar_lea.vmem [#allocation5], %s235
        // Predicated region
        $region33: #{tpu_custom_call.1} parent=27 // pred_check
          %p237 = pneg %p101
        $region34: #{tpu_custom_call.1} parent=27 // pred_check_branch
          %239 = sbr.rel (%p237) target = $region36
        $region35: #{tpu_custom_call.1} parent=27 // pred_region
          %240 = dma.done %s233, 32
        $region36: #{tpu_custom_call.1} parent=27 // pred_fallthru
          _
        %s241 = sand.u32 %s58, 1
        %s242 = scalar_lea.sflag [#allocation3], %s241
        %s243 = sand.u32 %s58, 1
        %s244 = smul.addr %s243, 2
        %s245 = scalar_lea.vmem [#allocation2], %s244
        %p246 = pneg %p71
        %p247 = pneg %p68
        %s248 = sand.u32 %s88, 1
        %s249 = scalar_lea.sflag [#allocation6], %s248
        %s250 = sand.u32 %s88, 1
        %s251 = smul.addr %s250, 2
        %s252 = scalar_lea.vmem [#allocation5], %s251
        %p253 = pneg %p101
        %p254 = pneg %p98
        %p255 = pneg %p129
        %p256 = pneg %p126
        %s257 = sand.u32 %s116, 1
        %s258 = scalar_lea.sflag [#allocation4], %s257
        %s259 = sand.u32 %s116, 1
        %s260 = smul.addr %s259, 8
        %s261 = scalar_lea.vmem [#allocation7], %s260
        %p262 = pneg %p157
        %p263 = pneg %p154
        %s264 = sand.u32 %s144, 1
        %s265 = scalar_lea.sflag [#allocation9], %s264
        %s266 = sand.u32 %s144, 1
        %s267 = smul.addr %s266, 8
        %s268 = scalar_lea.vmem [#allocation8], %s267
        %s269 = sadd.s32 %s33, %s34
        %s270 = sadd.s32 %s33, %s34
        %p271 = scmp.eq.s32.totalorder %s34, 0
        // Predicated region
        $region37: #{tpu_custom_call.1} parent=27 // pred_check
          %p272 = pneg %p271
        $region38: #{tpu_custom_call.1} parent=27 // pred_check_branch
          %274 = sbr.rel (%p272) target = $region40
        $region39: #{tpu_custom_call.1} parent=27 // pred_region
          %275 = vst [vmem:[%s261] sm:$0xff] 0.0
          %276 = vst [vmem:[%s268] sm:$0xff] 0.0
        $region40: #{tpu_custom_call.1} parent=27 // pred_fallthru
          _
        %v277 = vld [vmem:[%s227] sm:$0x3]
        %v278 = vld [vmem:[%s236] sm:$0x3]
        %v279 = vld [vmem:[%s261] sm:$0xff]
        %v280 = vmul.f32 %v277, %v278
        %vm281 = vcmask 1041408
        %v282 = vsel %vm281, %v280, 0.0
        %v283 = vrot.slane %v282, 4
        %v284 = vadd.f32 %v282, %v283
        %v285 = vrot.slane %v284, 2
        %v286 = vadd.f32 %v284, %v285
        %v287 = vrot.slane %v286, 1
        %v288 = vadd.f32 %v286, %v287
        %v289 = vlaneseq
        %v290 = vshrl.u32 %v289, 7
        %vm291 = vcmp.eq.s32.totalorder %v290, 0
        %v292 = vsel %vm291, %v288, 0.0
        %v293 = vadd.f32 %v279, %v292
        %294 = vst [vmem:[%s261] sm:$0xff] %v293
        %v295 = vld [vmem:[%s268] sm:$0xff]
        %v296 = vadd.f32 %v277, %v278
        %v297 = vsel %vm281, %v296, 0.0
        %v298 = vrot.slane %v297, 4
        %v299 = vadd.f32 %v297, %v298
        %v300 = vrot.slane %v299, 2
        %v301 = vadd.f32 %v299, %v300
        %v302 = vrot.slane %v301, 1
        %v303 = vadd.f32 %v301, %v302
        %v304 = vsel %vm291, %v303, 0.0
        %v305 = vadd.f32 %v295, %v304
        %306 = vst [vmem:[%s268] sm:$0xff] %v305
        %s307 = sand.u32 %s116, 1
        %s308 = scalar_lea.sflag [#allocation4], %s307
        %s309 = sand.u32 %s116, 1
        %s310 = smul.addr %s309, 8
        %s311 = scalar_lea.vmem [#allocation7], %s310
        %s312 = sand.u32 %s144, 1
        %s313 = scalar_lea.sflag [#allocation9], %s312
        %s314 = sand.u32 %s144, 1
        %s315 = smul.addr %s314, 8
        %s316 = scalar_lea.vmem [#allocation8], %s315
        // Predicated region
        $region41: #{tpu_custom_call.1} parent=27 // pred_check
          %p317 = pneg %p126
        $region42: #{tpu_custom_call.1} parent=27 // pred_check_branch
          %319 = sbr.rel (%p317) target = $region44
        $region43: #{tpu_custom_call.1} parent=27 // pred_region
          %s321 = ssub.s32 128, 128
          %322 = vsyncadd %s308, %s321
          %s323 = sadd.s32 %s33, %s32
          %s324 = smul.addr %s323, 128
          %s325 = scalar_lea.hbm %s2, %s324
          %s327 = sshll.u32 %s311, 4
          %s328 = int_to_ptr.vmem [resolvable:$true] %s327
          %330 = dma.vmem_to_hbm [thread:$0]  %s328, 128, %s325, %s308
        $region44: #{tpu_custom_call.1} parent=27 // pred_fallthru
          _
        // Predicated region
        $region45: #{tpu_custom_call.1} parent=27 // pred_check
          %p331 = pneg %p154
        $region46: #{tpu_custom_call.1} parent=27 // pred_check_branch
          %333 = sbr.rel (%p331) target = $region48
        $region47: #{tpu_custom_call.1} parent=27 // pred_region
          %s335 = ssub.s32 128, 128
          %336 = vsyncadd %s313, %s335
          %s337 = sadd.s32 %s33, %s32
          %s338 = smul.addr %s337, 128
          %s339 = scalar_lea.hbm %s3, %s338
          %s341 = sshll.u32 %s316, 4
          %s342 = int_to_ptr.vmem [resolvable:$true] %s341
          %344 = dma.vmem_to_hbm [thread:$0]  %s342, 128, %s339, %s313
        $region48: #{tpu_custom_call.1} parent=27 // pred_fallthru
          _
      $region28: #{tpu_custom_call.1} parent=5 // pred_fallthru
        _
      %p345 = scmp.le.s32.totalorder 2, %s22
      // Predicated region
      $region49: #{tpu_custom_call.1} parent=5 // pred_check
        %p346 = pneg %p345
      $region50: #{tpu_custom_call.1} parent=5 // pred_check_branch
        %348 = sbr.rel (%p346) target = $region52
      $region51: #{tpu_custom_call.1} parent=5 // pred_region
        %s349 = ssub.s32 %s22, 2
        // Predicated region
        $region53: #{tpu_custom_call.1} parent=51 // pred_check
          %p350 = pneg %p132
        $region54: #{tpu_custom_call.1} parent=51 // pred_check_branch
          %352 = sbr.rel (%p350) target = $region56
        $region55: #{tpu_custom_call.1} parent=51 // pred_region
          %s353 = sand.u32 %s117, 1
          %s354 = scalar_lea.sflag [#allocation4], %s353
          %s355 = sand.u32 %s117, 1
          %s356 = smul.addr %s355, 8
          %s357 = scalar_lea.vmem [#allocation7], %s356
          %358 = dma.done %s354, 128
        $region56: #{tpu_custom_call.1} parent=51 // pred_fallthru
          _
        // Predicated region
        $region57: #{tpu_custom_call.1} parent=51 // pred_check
          %p359 = pneg %p160
        $region58: #{tpu_custom_call.1} parent=51 // pred_check_branch
          %361 = sbr.rel (%p359) target = $region60
        $region59: #{tpu_custom_call.1} parent=51 // pred_region
          %s362 = sand.u32 %s145, 1
          %s363 = scalar_lea.sflag [#allocation9], %s362
          %s364 = sand.u32 %s145, 1
          %s365 = smul.addr %s364, 8
          %s366 = scalar_lea.vmem [#allocation8], %s365
          %367 = dma.done %s363, 128
        $region60: #{tpu_custom_call.1} parent=51 // pred_fallthru
          _
      $region52: #{tpu_custom_call.1} parent=5 // pred_fallthru
        _
    $region6: #{tpu_custom_call.1} parent=1 // loop_footer
      %s26 = sadd.s32 1, %s22
    $region7: #{tpu_custom_call.1} parent=1 // loop_footer_branch
      %21 = sbr.rel target = $region3
    $region8: #{tpu_custom_call.1} parent=1 // loop_exit
      _
    %368 = vsyncpa [#allocation3], 1
    %s369 = scalar_lea.sflag [#allocation3], 1
    %370 = vsyncpa %s369, 1
    %371 = vsyncpa [#allocation6], 1
    %s372 = scalar_lea.sflag [#allocation6], 1
    %373 = vsyncpa %s372, 1
    %374 = vsyncpa [#allocation4], 1
    %s375 = scalar_lea.sflag [#allocation4], 1
    %376 = vsyncpa %s375, 1
    %377 = vsyncpa [#allocation9], 1
    %s378 = scalar_lea.sflag [#allocation9], 1
    %379 = vsyncpa %s378, 1

</llo_original>
